<compile_context>
chip_gen: v5e
topology: v5e:2x2
jax: 0.10.0
libtpu: 0.0.40
codegen_flags: <defaults>
</compile_context>

<pallas_src>
import jax
import jax.numpy as jnp
from jax.experimental import pallas as pl
from jax.experimental.pallas import tpu as pltpu

# ---- config (cfg / global_cfg analogue) -------------------------------------
B, T = 2, 8
CAT_SIZES = (5, 7)                       # cfg.cat_sizes
EMB_DIMS = (4, 4)                        # cfg.emb_dims
N_NUM = 3                                # cfg.n_num_feats
INPUT_SIZE = sum(EMB_DIMS) + N_NUM       # = 11 (cfg.input_size)
RNN_HIDDEN = 32                          # cfg.rnn_hidden_size
HIDDEN = 32                              # cfg.hidden_size
PADDING_IDX = 0                          # global_cfg.padding
N_CLASSES = tuple(c + 1 for c in CAT_SIZES)

BC = 8                                   # batch rows per grid step (f32 sublane width)
OH = 16                                  # combined one-hot width (6 + 8 -> pad to bf16 tile)
NUM_PAD = 16                             # numeric feature lanes padded to bf16 tile
HEAD_OUT = 1 + sum(N_CLASSES)            # o (1) | marker0 (6) | marker1 (8) = 15
OUT_PAD = 128                            # lane-dense fused head output width
W_PACK_ROWS = OH + NUM_PAD + RNN_HIDDEN + RNN_HIDDEN   # 96 (all sections 16-row aligned)


def rmtpp_kernel(cat_ref, num_ref, len_ref,
                 w_pack_ref, w_heads_ref, b_hid_ref, b_heads_ref,
                 out_ref):
    """One batch chunk: in-kernel one-hot embedding, relu-RNN, fused heads.

    cat_ref  : (T*BC, 2)       int32 categorical indices (row = t*BC + b)
    num_ref  : (T*BC, NUM_PAD) bf16 numeric features (zero-padded lanes)
    len_ref  : (BC, 1)         int32 sequence lengths for this chunk
    w_pack_ref : (96, 32)      bf16 [w_cat | w_num | w_hh | w_hid], 16-row aligned
    w_heads_ref: (32, 128)     bf16 fused [out | marker0 | marker1 | pad] head weights
    out_ref  : (T*BC, 128)     f32 fused lane-dense head output
    """
    rows = T * BC

    # ---- combined one-hot for both categorical columns (in-kernel gather) ---
    idx0 = cat_ref[:, 0:1]                                     # values in [0, 5]
    idx1 = cat_ref[:, 1:2] + (CAT_SIZES[0] + 1)                # offset into [6, 13]
    lane = jax.lax.broadcasted_iota(jnp.int32, (rows, OH), 1)
    hit = jnp.logical_or(lane == idx0, lane == idx1)
    onehot = jnp.where(hit, 1.0, 0.0).astype(jnp.bfloat16)     # (rows, 16)

    # ---- static, tile-aligned sub-views of the packed weight buffer ---------
    w_cat = w_pack_ref[0:OH, :]                                      # (16, 32)
    w_num = w_pack_ref[OH:OH + NUM_PAD, :]                           # (16, 32)
    w_hh = w_pack_ref[OH + NUM_PAD:OH + NUM_PAD + RNN_HIDDEN, :]     # (32, 32)
    w_hid = w_pack_ref[OH + NUM_PAD + RNN_HIDDEN:W_PACK_ROWS, :]     # (32, 32)

    # ---- input projection hoisted out of the recurrence ---------------------
    # pre = emb(x) @ W_ih_cat + num @ W_ih_num + b_rnn   (b_rnn folded into the
    # segment-0 rows of w_cat; each row's one-hot hits that segment exactly once)
    pre = (jnp.dot(onehot, w_cat, preferred_element_type=jnp.float32)
           + jnp.dot(num_ref[...], w_num, preferred_element_type=jnp.float32))

    lens = len_ref[...]                                        # (BC, 1) int32

    # ---- RNN (nonlinearity='relu') recurrence, sequential over time ---------
    # Only h @ W_hh (bf16, single MXU pass) remains on the serial chain; T is
    # tiny and static so a fully unrolled loop keeps everything in vregs.
    # TODO(synk): could hold W_hh in MXU staging via pltpu.matmul_push_rhs; with
    # the full unroll the loop-invariant RHS is already hoisted by Mosaic.
    h = jnp.zeros((BC, RNN_HIDDEN), jnp.float32)
    blocks = []
    for t in range(T):
        r0 = t * BC
        h = jnp.maximum(
            pre[r0:r0 + BC, :]
            + jnp.dot(h.astype(jnp.bfloat16), w_hh,
                      preferred_element_type=jnp.float32),
            0.0)                                               # relu, (BC, 32) f32
        # pad_packed emulation: zero hidden OUTPUTS past each sequence length.
        # (off the serial chain: the unmasked h feeds the next step)
        blocks.append(jnp.where(lens > t, h, 0.0))

    h_pad = jnp.concatenate(blocks, axis=0)                    # (rows, 32) f32, registers

    # ---- heads: hidden linear + tanh, then one fused lane-dense head matmul -
    hj = jnp.tanh(jnp.dot(h_pad.astype(jnp.bfloat16), w_hid,
                          preferred_element_type=jnp.float32) + b_hid_ref[...])

    out_ref[...] = (jnp.dot(hj.astype(jnp.bfloat16), w_heads_ref[...],
                            preferred_element_type=jnp.float32)
                    + b_heads_ref[...])                        # (rows, 128) f32


def init_params(key):
    """Deterministic synthetic parameters (shapes follow RMTPP.__init__),
    pre-packed / pre-folded into the kernel's layout."""
    ks = jax.random.split(key, 13)
    nrm = lambda k, shp: (0.1 * jax.random.normal(k, shp)).astype(jnp.float32)

    # embedding tables, padding_idx row zeroed
    emb0 = nrm(ks[0], (CAT_SIZES[0] + 1, EMB_DIMS[0])).at[PADDING_IDX].set(0.0)
    emb1 = nrm(ks[1], (CAT_SIZES[1] + 1, EMB_DIMS[1])).at[PADDING_IDX].set(0.0)

    # RNN weights stored pre-transposed (x @ W); b_rnn = b_ih + b_hh folded
    w_ih = nrm(ks[2], (INPUT_SIZE, RNN_HIDDEN))
    w_hh = nrm(ks[3], (RNN_HIDDEN, RNN_HIDDEN))
    b_rnn = nrm(ks[4], (1, RNN_HIDDEN))
    w_hid = nrm(ks[5], (RNN_HIDDEN, HIDDEN))
    b_hid = nrm(ks[6], (1, HIDDEN))

    # heads (output_dense + marker heads)
    w_out = nrm(ks[7], (HIDDEN, 1));            b_out = nrm(ks[8], (1, 1))
    w_m0 = nrm(ks[9], (HIDDEN, N_CLASSES[0]));  b_m0 = nrm(ks[10], (1, N_CLASSES[0]))
    w_m1 = nrm(ks[11], (HIDDEN, N_CLASSES[1])); b_m1 = nrm(ks[12], (1, N_CLASSES[1]))

    # ---- fold embedding tables into the input projection --------------------
    w_e0 = w_ih[0:EMB_DIMS[0]]                                 # (4, 32)
    w_e1 = w_ih[EMB_DIMS[0]:EMB_DIMS[0] + EMB_DIMS[1]]         # (4, 32)
    w_nm = w_ih[sum(EMB_DIMS):]                                # (3, 32)
    w_cat = jnp.zeros((OH, RNN_HIDDEN), jnp.float32)
    w_cat = w_cat.at[0:CAT_SIZES[0] + 1].set(emb0 @ w_e0 + b_rnn)   # b_rnn folded here
    w_cat = w_cat.at[CAT_SIZES[0] + 1:CAT_SIZES[0] + 1 + CAT_SIZES[1] + 1].set(emb1 @ w_e1)
    w_num = jnp.zeros((NUM_PAD, RNN_HIDDEN), jnp.float32).at[0:N_NUM].set(w_nm)

    # one packed bf16 buffer for all 32-lane weights, 16-row aligned sections
    w_pack = jnp.concatenate([w_cat, w_num, w_hh, w_hid], axis=0).astype(jnp.bfloat16)

    # fused + lane-padded head weights / biases
    w_heads = jnp.concatenate([w_out, w_m0, w_m1], axis=1)           # (32, 15)
    w_heads = jnp.pad(w_heads, ((0, 0), (0, OUT_PAD - HEAD_OUT))).astype(jnp.bfloat16)
    b_heads = jnp.concatenate([b_out, b_m0, b_m1], axis=1)           # (1, 15)
    b_heads = jnp.pad(b_heads, ((0, 0), (0, OUT_PAD - HEAD_OUT)))    # (1, 128) f32

    return dict(w_pack=w_pack, w_heads=w_heads, b_hid=b_hid, b_heads=b_heads)


@jax.jit
def rmtpp_forward(params, cat_feats, num_feats, lengths):
    """JIT-fused wrapper: layout plumbing + one pallas_call + output unpack."""
    b_in = cat_feats.shape[0]
    nb = -(-b_in // BC)                  # batch chunks (grid size)
    b_pad = nb * BC

    def chunk_rows(x, lane_pad):
        # (B, T, F) -> (nb, T*BC, F+lane_pad), row within chunk = t*BC + local_b
        x = jnp.pad(x, ((0, b_pad - b_in), (0, 0), (0, lane_pad)))
        x = x.reshape(nb, BC, T, x.shape[-1]).transpose(0, 2, 1, 3)
        return x.reshape(nb, T * BC, x.shape[-1])

    cat3 = chunk_rows(cat_feats.astype(jnp.int32), 0)                      # (nb, T*BC, 2)
    num3 = chunk_rows(num_feats.astype(jnp.float32),
                      NUM_PAD - N_NUM).astype(jnp.bfloat16)                # (nb, T*BC, 16)
    len3 = jnp.pad(lengths.astype(jnp.int32), (0, b_pad - b_in)).reshape(nb, BC, 1)

    const2 = lambda i: (0, 0)            # weights: DMA once, stay VMEM-resident
    out = pl.pallas_call(
        rmtpp_kernel,
        out_shape=jax.ShapeDtypeStruct((nb, T * BC, OUT_PAD), jnp.float32),
        grid=(nb,),
        in_specs=[
            pl.BlockSpec((None, T * BC, 2), lambda i: (i, 0, 0)),
            pl.BlockSpec((None, T * BC, NUM_PAD), lambda i: (i, 0, 0)),
            pl.BlockSpec((None, BC, 1), lambda i: (i, 0, 0)),
            pl.BlockSpec((W_PACK_ROWS, RNN_HIDDEN), const2),
            pl.BlockSpec((HIDDEN, OUT_PAD), const2),
            pl.BlockSpec((1, HIDDEN), const2),
            pl.BlockSpec((1, OUT_PAD), const2),
        ],
        out_specs=pl.BlockSpec((None, T * BC, OUT_PAD), lambda i: (i, 0, 0)),
        compiler_params=pltpu.CompilerParams(dimension_semantics=("parallel",)),
    )(cat3, num3, len3,
      params["w_pack"], params["w_heads"], params["b_hid"], params["b_heads"])

    # unpack fused lane-dense output back to the PyTorch-shaped results
    out = out.reshape(nb, T, BC, OUT_PAD).transpose(0, 2, 1, 3)        # (nb, BC, T, 128)
    out = out.reshape(b_pad, T, OUT_PAD)[:b_in, :, :HEAD_OUT]          # (B, T, 15)
    o_j = out[:, :, 0]                                                 # (B, T) == .squeeze()
    c0 = N_CLASSES[0]
    ys_j = [out[:, :, 1:1 + c0],                                       # (B, T, C0+1)
            out[:, :, 1 + c0:1 + c0 + N_CLASSES[1]]]                   # (B, T, C1+1)
    return o_j, ys_j


if __name__ == "__main__":
    key = jax.random.PRNGKey(0)
    pkey, kc, kn = jax.random.split(key, 3)

    params = init_params(pkey)

    # categorical features: column i takes values in [0, cat_sizes[i]]
    cat_cols = [
        jax.random.randint(jax.random.fold_in(kc, i), (B, T, 1), 0, cs + 1)
        for i, cs in enumerate(CAT_SIZES)
    ]
    cat_feats = jnp.concatenate(cat_cols, axis=-1).astype(jnp.int32)      # (B, T, 2)
    num_feats = jax.random.normal(kn, (B, T, N_NUM), jnp.float32)         # (B, T, 3)
    lengths = jnp.array([T, T - 3], dtype=jnp.int32)                      # max(lengths) == T

    o_j, ys_j = rmtpp_forward(params, cat_feats, num_feats, lengths)
    jax.block_until_ready((o_j, ys_j))

    assert o_j.shape == (B, T)
    assert ys_j[0].shape == (B, T, N_CLASSES[0])
    assert ys_j[1].shape == (B, T, N_CLASSES[1])
    print("KERNEL_OK")
</pallas_src>

<mosaic_0001>
module attributes {stable_mosaic.version = 11 : i64} {
  func.func @rmtpp_kernel(%arg0: i32, %arg1: memref<1x64x2xi32, #tpu.memory_space<vmem>>, %arg2: memref<1x64x16xbf16, #tpu.memory_space<vmem>>, %arg3: memref<1x8x1xi32, #tpu.memory_space<vmem>>, %arg4: memref<96x32xbf16, #tpu.memory_space<vmem>>, %arg5: memref<32x128xbf16, #tpu.memory_space<vmem>>, %arg6: memref<1x32xf32, #tpu.memory_space<vmem>>, %arg7: memref<1x128xf32, #tpu.memory_space<vmem>>, %arg8: memref<1x64x128xf32, #tpu.memory_space<vmem>>) attributes {dimension_semantics = [#tpu.dimension_semantics<parallel>], iteration_bounds = array<i64: 1>, scalar_prefetch = 0 : i64, scratch_operands = 0 : i64, tpu.core_type = #tpu.core_type<tc>, window_params = [{transform_indices = @transform_0, window_bounds = array<i64: 1, 64, 2>}, {transform_indices = @transform_1, window_bounds = array<i64: 1, 64, 16>}, {transform_indices = @transform_2, window_bounds = array<i64: 1, 8, 1>}, {pipeline_mode = #tpu.pipeline_mode<synchronous>, transform_indices = @transform_3, window_bounds = array<i64: 96, 32>}, {pipeline_mode = #tpu.pipeline_mode<synchronous>, transform_indices = @transform_4, window_bounds = array<i64: 32, 128>}, {pipeline_mode = #tpu.pipeline_mode<synchronous>, transform_indices = @transform_5, window_bounds = array<i64: 1, 32>}, {pipeline_mode = #tpu.pipeline_mode<synchronous>, transform_indices = @transform_6, window_bounds = array<i64: 1, 128>}, {transform_indices = @transform_7, window_bounds = array<i64: 1, 64, 128>}]} {
    %c0 = arith.constant 0 : index
    %c0_0 = arith.constant 0 : index
    %c0_1 = arith.constant 0 : index
    %0 = vector.load %arg1[%c0, %c0_0, %c0_1] : memref<1x64x2xi32, #tpu.memory_space<vmem>>, vector<1x64x1xi32>
    %1 = vector.shape_cast %0 : vector<1x64x1xi32> to vector<64x1xi32>
    %c0_2 = arith.constant 0 : index
    %c0_3 = arith.constant 0 : index
    %c1 = arith.constant 1 : index
    %2 = vector.load %arg1[%c0_2, %c0_3, %c1] : memref<1x64x2xi32, #tpu.memory_space<vmem>>, vector<1x64x1xi32>
    %3 = vector.shape_cast %2 : vector<1x64x1xi32> to vector<64x1xi32>
    %c6_i32 = arith.constant 6 : i32
    %4 = vector.broadcast %c6_i32 : i32 to vector<64x1xi32>
    %5 = arith.addi %3, %4 : vector<64x1xi32>
    %6 = tpu.iota {dimensions = array<i32: 1>} : vector<64x16xi32>
    %7 = vector.broadcast %1 : vector<64x1xi32> to vector<64x16xi32>
    %8 = arith.cmpi eq, %6, %7 : vector<64x16xi32>
    %9 = vector.broadcast %5 : vector<64x1xi32> to vector<64x16xi32>
    %10 = arith.cmpi eq, %6, %9 : vector<64x16xi32>
    %11 = arith.ori %8, %10 : vector<64x16xi1>
    %cst = arith.constant 1.000000e+00 : f32
    %cst_4 = arith.constant 0.000000e+00 : f32
    %12 = vector.broadcast %cst : f32 to vector<64x16xf32>
    %13 = vector.broadcast %cst_4 : f32 to vector<64x16xf32>
    %14 = arith.select %11, %12, %13 : vector<64x16xi1>, vector<64x16xf32>
    %15 = arith.truncf %14 : vector<64x16xf32> to vector<64x16xbf16>
    %c0_5 = arith.constant 0 : index
    %c0_6 = arith.constant 0 : index
    %16 = vector.load %arg4[%c0_5, %c0_6] : memref<96x32xbf16, #tpu.memory_space<vmem>>, vector<16x32xbf16>
    %c16 = arith.constant 16 : index
    %c0_7 = arith.constant 0 : index
    %17 = vector.load %arg4[%c16, %c0_7] : memref<96x32xbf16, #tpu.memory_space<vmem>>, vector<16x32xbf16>
    %c32 = arith.constant 32 : index
    %c0_8 = arith.constant 0 : index
    %18 = vector.load %arg4[%c32, %c0_8] : memref<96x32xbf16, #tpu.memory_space<vmem>>, vector<32x32xbf16>
    %c64 = arith.constant 64 : index
    %c0_9 = arith.constant 0 : index
    %19 = vector.load %arg4[%c64, %c0_9] : memref<96x32xbf16, #tpu.memory_space<vmem>>, vector<32x32xbf16>
    %cst_10 = arith.constant dense<0.000000e+00> : vector<64x32xf32>
    %20 = tpu.matmul %15, %16, %cst_10 {dimension_numbers = #tpu.dot_dimension_numbers<[1], [0], [0], [1], [0, 0, 1, 1], [], []>} : vector<64x16xbf16>, vector<16x32xbf16>, vector<64x32xf32> -> vector<64x32xf32>
    %c0_11 = arith.constant 0 : index
    %c0_12 = arith.constant 0 : index
    %c0_13 = arith.constant 0 : index
    %21 = vector.load %arg2[%c0_11, %c0_12, %c0_13] : memref<1x64x16xbf16, #tpu.memory_space<vmem>>, vector<1x64x16xbf16>
    %22 = vector.shape_cast %21 : vector<1x64x16xbf16> to vector<64x16xbf16>
    %cst_14 = arith.constant dense<0.000000e+00> : vector<64x32xf32>
    %23 = tpu.matmul %22, %17, %cst_14 {dimension_numbers = #tpu.dot_dimension_numbers<[1], [0], [0], [1], [0, 0, 1, 1], [], []>} : vector<64x16xbf16>, vector<16x32xbf16>, vector<64x32xf32> -> vector<64x32xf32>
    %24 = arith.addf %20, %23 : vector<64x32xf32>
    %c0_15 = arith.constant 0 : index
    %c0_16 = arith.constant 0 : index
    %c0_17 = arith.constant 0 : index
    %25 = vector.load %arg3[%c0_15, %c0_16, %c0_17] : memref<1x8x1xi32, #tpu.memory_space<vmem>>, vector<1x8x1xi32>
    %26 = vector.shape_cast %25 : vector<1x8x1xi32> to vector<8x1xi32>
    %cst_18 = arith.constant 0.000000e+00 : f32
    %27 = vector.broadcast %cst_18 : f32 to vector<8x32xf32>
    %28 = vector.extract_strided_slice %24 {offsets = [0, 0], sizes = [8, 32], strides = [1, 1]} : vector<64x32xf32> to vector<8x32xf32>
    %29 = arith.truncf %27 : vector<8x32xf32> to vector<8x32xbf16>
    %cst_19 = arith.constant dense<0.000000e+00> : vector<8x32xf32>
    %30 = tpu.matmul %29, %18, %cst_19 {dimension_numbers = #tpu.dot_dimension_numbers<[1], [0], [0], [1], [0, 0, 1, 1], [], []>} : vector<8x32xbf16>, vector<32x32xbf16>, vector<8x32xf32> -> vector<8x32xf32>
    %31 = arith.addf %28, %30 : vector<8x32xf32>
    %cst_20 = arith.constant 0.000000e+00 : f32
    %32 = vector.broadcast %cst_20 : f32 to vector<8x32xf32>
    %33 = arith.maximumf %31, %32 : vector<8x32xf32>
    %c0_i32 = arith.constant 0 : i32
    %34 = vector.broadcast %c0_i32 : i32 to vector<8x1xi32>
    %35 = arith.cmpi sgt, %26, %34 : vector<8x1xi32>
    %cst_21 = arith.constant 0.000000e+00 : f32
    %36 = vector.shape_cast %35 : vector<8x1xi1> to vector<8x1xi1>
    %37 = vector.broadcast %36 : vector<8x1xi1> to vector<8x32xi1>
    %38 = vector.broadcast %cst_21 : f32 to vector<8x32xf32>
    %39 = arith.select %37, %33, %38 : vector<8x32xi1>, vector<8x32xf32>
    %40 = vector.extract_strided_slice %24 {offsets = [8, 0], sizes = [8, 32], strides = [1, 1]} : vector<64x32xf32> to vector<8x32xf32>
    %41 = arith.truncf %33 : vector<8x32xf32> to vector<8x32xbf16>
    %cst_22 = arith.constant dense<0.000000e+00> : vector<8x32xf32>
    %42 = tpu.matmul %41, %18, %cst_22 {dimension_numbers = #tpu.dot_dimension_numbers<[1], [0], [0], [1], [0, 0, 1, 1], [], []>} : vector<8x32xbf16>, vector<32x32xbf16>, vector<8x32xf32> -> vector<8x32xf32>
    %43 = arith.addf %40, %42 : vector<8x32xf32>
    %cst_23 = arith.constant 0.000000e+00 : f32
    %44 = vector.broadcast %cst_23 : f32 to vector<8x32xf32>
    %45 = arith.maximumf %43, %44 : vector<8x32xf32>
    %c1_i32 = arith.constant 1 : i32
    %46 = vector.broadcast %c1_i32 : i32 to vector<8x1xi32>
    %47 = arith.cmpi sgt, %26, %46 : vector<8x1xi32>
    %cst_24 = arith.constant 0.000000e+00 : f32
    %48 = vector.shape_cast %47 : vector<8x1xi1> to vector<8x1xi1>
    %49 = vector.broadcast %48 : vector<8x1xi1> to vector<8x32xi1>
    %50 = vector.broadcast %cst_24 : f32 to vector<8x32xf32>
    %51 = arith.select %49, %45, %50 : vector<8x32xi1>, vector<8x32xf32>
    %52 = vector.extract_strided_slice %24 {offsets = [16, 0], sizes = [8, 32], strides = [1, 1]} : vector<64x32xf32> to vector<8x32xf32>
    %53 = arith.truncf %45 : vector<8x32xf32> to vector<8x32xbf16>
    %cst_25 = arith.constant dense<0.000000e+00> : vector<8x32xf32>
    %54 = tpu.matmul %53, %18, %cst_25 {dimension_numbers = #tpu.dot_dimension_numbers<[1], [0], [0], [1], [0, 0, 1, 1], [], []>} : vector<8x32xbf16>, vector<32x32xbf16>, vector<8x32xf32> -> vector<8x32xf32>
    %55 = arith.addf %52, %54 : vector<8x32xf32>
    %cst_26 = arith.constant 0.000000e+00 : f32
    %56 = vector.broadcast %cst_26 : f32 to vector<8x32xf32>
    %57 = arith.maximumf %55, %56 : vector<8x32xf32>
    %c2_i32 = arith.constant 2 : i32
    %58 = vector.broadcast %c2_i32 : i32 to vector<8x1xi32>
    %59 = arith.cmpi sgt, %26, %58 : vector<8x1xi32>
    %cst_27 = arith.constant 0.000000e+00 : f32
    %60 = vector.shape_cast %59 : vector<8x1xi1> to vector<8x1xi1>
    %61 = vector.broadcast %60 : vector<8x1xi1> to vector<8x32xi1>
    %62 = vector.broadcast %cst_27 : f32 to vector<8x32xf32>
    %63 = arith.select %61, %57, %62 : vector<8x32xi1>, vector<8x32xf32>
    %64 = vector.extract_strided_slice %24 {offsets = [24, 0], sizes = [8, 32], strides = [1, 1]} : vector<64x32xf32> to vector<8x32xf32>
    %65 = arith.truncf %57 : vector<8x32xf32> to vector<8x32xbf16>
    %cst_28 = arith.constant dense<0.000000e+00> : vector<8x32xf32>
    %66 = tpu.matmul %65, %18, %cst_28 {dimension_numbers = #tpu.dot_dimension_numbers<[1], [0], [0], [1], [0, 0, 1, 1], [], []>} : vector<8x32xbf16>, vector<32x32xbf16>, vector<8x32xf32> -> vector<8x32xf32>
    %67 = arith.addf %64, %66 : vector<8x32xf32>
    %cst_29 = arith.constant 0.000000e+00 : f32
    %68 = vector.broadcast %cst_29 : f32 to vector<8x32xf32>
    %69 = arith.maximumf %67, %68 : vector<8x32xf32>
    %c3_i32 = arith.constant 3 : i32
    %70 = vector.broadcast %c3_i32 : i32 to vector<8x1xi32>
    %71 = arith.cmpi sgt, %26, %70 : vector<8x1xi32>
    %cst_30 = arith.constant 0.000000e+00 : f32
    %72 = vector.shape_cast %71 : vector<8x1xi1> to vector<8x1xi1>
    %73 = vector.broadcast %72 : vector<8x1xi1> to vector<8x32xi1>
    %74 = vector.broadcast %cst_30 : f32 to vector<8x32xf32>
    %75 = arith.select %73, %69, %74 : vector<8x32xi1>, vector<8x32xf32>
    %76 = vector.extract_strided_slice %24 {offsets = [32, 0], sizes = [8, 32], strides = [1, 1]} : vector<64x32xf32> to vector<8x32xf32>
    %77 = arith.truncf %69 : vector<8x32xf32> to vector<8x32xbf16>
    %cst_31 = arith.constant dense<0.000000e+00> : vector<8x32xf32>
    %78 = tpu.matmul %77, %18, %cst_31 {dimension_numbers = #tpu.dot_dimension_numbers<[1], [0], [0], [1], [0, 0, 1, 1], [], []>} : vector<8x32xbf16>, vector<32x32xbf16>, vector<8x32xf32> -> vector<8x32xf32>
    %79 = arith.addf %76, %78 : vector<8x32xf32>
    %cst_32 = arith.constant 0.000000e+00 : f32
    %80 = vector.broadcast %cst_32 : f32 to vector<8x32xf32>
    %81 = arith.maximumf %79, %80 : vector<8x32xf32>
    %c4_i32 = arith.constant 4 : i32
    %82 = vector.broadcast %c4_i32 : i32 to vector<8x1xi32>
    %83 = arith.cmpi sgt, %26, %82 : vector<8x1xi32>
    %cst_33 = arith.constant 0.000000e+00 : f32
    %84 = vector.shape_cast %83 : vector<8x1xi1> to vector<8x1xi1>
    %85 = vector.broadcast %84 : vector<8x1xi1> to vector<8x32xi1>
    %86 = vector.broadcast %cst_33 : f32 to vector<8x32xf32>
    %87 = arith.select %85, %81, %86 : vector<8x32xi1>, vector<8x32xf32>
    %88 = vector.extract_strided_slice %24 {offsets = [40, 0], sizes = [8, 32], strides = [1, 1]} : vector<64x32xf32> to vector<8x32xf32>
    %89 = arith.truncf %81 : vector<8x32xf32> to vector<8x32xbf16>
    %cst_34 = arith.constant dense<0.000000e+00> : vector<8x32xf32>
    %90 = tpu.matmul %89, %18, %cst_34 {dimension_numbers = #tpu.dot_dimension_numbers<[1], [0], [0], [1], [0, 0, 1, 1], [], []>} : vector<8x32xbf16>, vector<32x32xbf16>, vector<8x32xf32> -> vector<8x32xf32>
    %91 = arith.addf %88, %90 : vector<8x32xf32>
    %cst_35 = arith.constant 0.000000e+00 : f32
    %92 = vector.broadcast %cst_35 : f32 to vector<8x32xf32>
    %93 = arith.maximumf %91, %92 : vector<8x32xf32>
    %c5_i32 = arith.constant 5 : i32
    %94 = vector.broadcast %c5_i32 : i32 to vector<8x1xi32>
    %95 = arith.cmpi sgt, %26, %94 : vector<8x1xi32>
    %cst_36 = arith.constant 0.000000e+00 : f32
    %96 = vector.shape_cast %95 : vector<8x1xi1> to vector<8x1xi1>
    %97 = vector.broadcast %96 : vector<8x1xi1> to vector<8x32xi1>
    %98 = vector.broadcast %cst_36 : f32 to vector<8x32xf32>
    %99 = arith.select %97, %93, %98 : vector<8x32xi1>, vector<8x32xf32>
    %100 = vector.extract_strided_slice %24 {offsets = [48, 0], sizes = [8, 32], strides = [1, 1]} : vector<64x32xf32> to vector<8x32xf32>
    %101 = arith.truncf %93 : vector<8x32xf32> to vector<8x32xbf16>
    %cst_37 = arith.constant dense<0.000000e+00> : vector<8x32xf32>
    %102 = tpu.matmul %101, %18, %cst_37 {dimension_numbers = #tpu.dot_dimension_numbers<[1], [0], [0], [1], [0, 0, 1, 1], [], []>} : vector<8x32xbf16>, vector<32x32xbf16>, vector<8x32xf32> -> vector<8x32xf32>
    %103 = arith.addf %100, %102 : vector<8x32xf32>
    %cst_38 = arith.constant 0.000000e+00 : f32
    %104 = vector.broadcast %cst_38 : f32 to vector<8x32xf32>
    %105 = arith.maximumf %103, %104 : vector<8x32xf32>
    %c6_i32_39 = arith.constant 6 : i32
    %106 = vector.broadcast %c6_i32_39 : i32 to vector<8x1xi32>
    %107 = arith.cmpi sgt, %26, %106 : vector<8x1xi32>
    %cst_40 = arith.constant 0.000000e+00 : f32
    %108 = vector.shape_cast %107 : vector<8x1xi1> to vector<8x1xi1>
    %109 = vector.broadcast %108 : vector<8x1xi1> to vector<8x32xi1>
    %110 = vector.broadcast %cst_40 : f32 to vector<8x32xf32>
    %111 = arith.select %109, %105, %110 : vector<8x32xi1>, vector<8x32xf32>
    %112 = vector.extract_strided_slice %24 {offsets = [56, 0], sizes = [8, 32], strides = [1, 1]} : vector<64x32xf32> to vector<8x32xf32>
    %113 = arith.truncf %105 : vector<8x32xf32> to vector<8x32xbf16>
    %cst_41 = arith.constant dense<0.000000e+00> : vector<8x32xf32>
    %114 = tpu.matmul %113, %18, %cst_41 {dimension_numbers = #tpu.dot_dimension_numbers<[1], [0], [0], [1], [0, 0, 1, 1], [], []>} : vector<8x32xbf16>, vector<32x32xbf16>, vector<8x32xf32> -> vector<8x32xf32>
    %115 = arith.addf %112, %114 : vector<8x32xf32>
    %cst_42 = arith.constant 0.000000e+00 : f32
    %116 = vector.broadcast %cst_42 : f32 to vector<8x32xf32>
    %117 = arith.maximumf %115, %116 : vector<8x32xf32>
    %c7_i32 = arith.constant 7 : i32
    %118 = vector.broadcast %c7_i32 : i32 to vector<8x1xi32>
    %119 = arith.cmpi sgt, %26, %118 : vector<8x1xi32>
    %cst_43 = arith.constant 0.000000e+00 : f32
    %120 = vector.shape_cast %119 : vector<8x1xi1> to vector<8x1xi1>
    %121 = vector.broadcast %120 : vector<8x1xi1> to vector<8x32xi1>
    %122 = vector.broadcast %cst_43 : f32 to vector<8x32xf32>
    %123 = arith.select %121, %117, %122 : vector<8x32xi1>, vector<8x32xf32>
    %124 = tpu.concatenate %39, %51, %63, %75, %87, %99, %111, %123 in 0 : vector<8x32xf32>, vector<8x32xf32>, vector<8x32xf32>, vector<8x32xf32>, vector<8x32xf32>, vector<8x32xf32>, vector<8x32xf32>, vector<8x32xf32> -> vector<64x32xf32>
    %125 = arith.truncf %124 : vector<64x32xf32> to vector<64x32xbf16>
    %cst_44 = arith.constant dense<0.000000e+00> : vector<64x32xf32>
    %126 = tpu.matmul %125, %19, %cst_44 {dimension_numbers = #tpu.dot_dimension_numbers<[1], [0], [0], [1], [0, 0, 1, 1], [], []>} : vector<64x32xbf16>, vector<32x32xbf16>, vector<64x32xf32> -> vector<64x32xf32>
    %c0_45 = arith.constant 0 : index
    %c0_46 = arith.constant 0 : index
    %127 = vector.load %arg6[%c0_45, %c0_46] : memref<1x32xf32, #tpu.memory_space<vmem>>, vector<1x32xf32>
    %128 = vector.broadcast %127 : vector<1x32xf32> to vector<64x32xf32>
    %129 = arith.addf %126, %128 : vector<64x32xf32>
    %130 = math.tanh %129 : vector<64x32xf32>
    %131 = arith.truncf %130 : vector<64x32xf32> to vector<64x32xbf16>
    %c0_47 = arith.constant 0 : index
    %c0_48 = arith.constant 0 : index
    %132 = vector.load %arg5[%c0_47, %c0_48] : memref<32x128xbf16, #tpu.memory_space<vmem>>, vector<32x128xbf16>
    %cst_49 = arith.constant dense<0.000000e+00> : vector<64x128xf32>
    %133 = tpu.matmul %131, %132, %cst_49 {dimension_numbers = #tpu.dot_dimension_numbers<[1], [0], [0], [1], [0, 0, 1, 1], [], []>} : vector<64x32xbf16>, vector<32x128xbf16>, vector<64x128xf32> -> vector<64x128xf32>
    %c0_50 = arith.constant 0 : index
    %c0_51 = arith.constant 0 : index
    %134 = vector.load %arg7[%c0_50, %c0_51] : memref<1x128xf32, #tpu.memory_space<vmem>>, vector<1x128xf32>
    %135 = vector.broadcast %134 : vector<1x128xf32> to vector<64x128xf32>
    %136 = arith.addf %133, %135 : vector<64x128xf32>
    %c0_52 = arith.constant 0 : index
    %c0_53 = arith.constant 0 : index
    %c0_54 = arith.constant 0 : index
    %137 = vector.load %arg8[%c0_52, %c0_53, %c0_54] : memref<1x64x128xf32, #tpu.memory_space<vmem>>, vector<1x64x128xf32>
    %138 = vector.shape_cast %137 : vector<1x64x128xf32> to vector<64x128xf32>
    %139 = vector.shape_cast %136 : vector<64x128xf32> to vector<1x64x128xf32>
    tpu.vector_store %arg8[%c0_52, %c0_53, %c0_54], %139 {strides = array<i32>} : memref<1x64x128xf32, #tpu.memory_space<vmem>>, vector<1x64x128xf32>,
    return
  }
  func.func @transform_0(%arg0: i32) -> (i32, i32, i32) {
    %c0_i32 = arith.constant 0 : i32
    %c0_i32_0 = arith.constant 0 : i32
    %c0_i32_1 = arith.constant 0 : i32
    return %arg0, %c0_i32, %c0_i32_0 : i32, i32, i32
  }
  func.func @transform_1(%arg0: i32) -> (i32, i32, i32) {
    %c0_i32 = arith.constant 0 : i32
    %c0_i32_0 = arith.constant 0 : i32
    %c0_i32_1 = arith.constant 0 : i32
    return %arg0, %c0_i32, %c0_i32_0 : i32, i32, i32
  }
  func.func @transform_2(%arg0: i32) -> (i32, i32, i32) {
    %c0_i32 = arith.constant 0 : i32
    %c0_i32_0 = arith.constant 0 : i32
    %c0_i32_1 = arith.constant 0 : i32
    return %arg0, %c0_i32, %c0_i32_0 : i32, i32, i32
  }
  func.func @transform_3(%arg0: i32) -> (i32, i32) {
    %c0_i32 = arith.constant 0 : i32
    %c0_i32_0 = arith.constant 0 : i32
    %c0_i32_1 = arith.constant 0 : i32
    return %c0_i32, %c0_i32_0 : i32, i32
  }
  func.func @transform_4(%arg0: i32) -> (i32, i32) {
    %c0_i32 = arith.constant 0 : i32
    %c0_i32_0 = arith.constant 0 : i32
    %c0_i32_1 = arith.constant 0 : i32
    return %c0_i32, %c0_i32_0 : i32, i32
  }
  func.func @transform_5(%arg0: i32) -> (i32, i32) {
    %c0_i32 = arith.constant 0 : i32
    %c0_i32_0 = arith.constant 0 : i32
    %c0_i32_1 = arith.constant 0 : i32
    return %c0_i32, %c0_i32_0 : i32, i32
  }
  func.func @transform_6(%arg0: i32) -> (i32, i32) {
    %c0_i32 = arith.constant 0 : i32
    %c0_i32_0 = arith.constant 0 : i32
    %c0_i32_1 = arith.constant 0 : i32
    return %c0_i32, %c0_i32_0 : i32, i32
  }
  func.func @transform_7(%arg0: i32) -> (i32, i32, i32) {
    %c0_i32 = arith.constant 0 : i32
    %c0_i32_0 = arith.constant 0 : i32
    %c0_i32_1 = arith.constant 0 : i32
    return %arg0, %c0_i32, %c0_i32_0 : i32, i32, i32
  }
}

</mosaic_0001>

<llo_original>
// kernel: rmtpp_forward.1
$region0: #{rmtpp_forward.1}
  #allocation0 [shape = 'u32[]', space=smem, size = 0x4, offset = 0x4, fixed_abs, tag = 'smem constant byte address 0x4 - core index']
  #allocation1 [shape = 'u32[72,128]{1,0:T(1,128)}', space=vmem, size = 0x9000, scoped, tag = 'internal scratch']
  %s0 = inlined_call_operand.vmem [shape: s32[1,64,2], index: 0, kind: input, shape index: {}]
  %s1 = inlined_call_operand.vmem [shape: bf16[1,64,16], index: 1, kind: input, shape index: {}]
  %s2 = inlined_call_operand.vmem [shape: s32[1,8,1], index: 2, kind: input, shape index: {}]
  %s3 = inlined_call_operand.vmem [shape: bf16[96,32], index: 3, kind: input, shape index: {}]
  %s4 = inlined_call_operand.vmem [shape: bf16[32,128], index: 4, kind: input, shape index: {}]
  %s5 = inlined_call_operand.vmem [shape: f32[1,32], index: 5, kind: input, shape index: {}]
  %s6 = inlined_call_operand.vmem [shape: f32[1,128], index: 6, kind: input, shape index: {}]
  %s7 = inlined_call_operand.vmem [shape: f32[1,64,128], index: 7, kind: output, shape index: {}]
  %s8 = sld [smem:[#allocation0]]
  $region38: #{rmtpp_forward.1} parent=0
    _
  %s10 = ssub.s32 1, %s8
  %s11 = scalar_select 0, %s10, %s8
  // Predicated region
  $region2: #{rmtpp_forward.1} parent=0 // pred_check
    _
  $region3: #{rmtpp_forward.1} parent=0 // pred_check_branch
    %13 = sbr.rel (0) target = $region5
  $region4: #{rmtpp_forward.1} parent=0 // pred_region
    _
  $region5: #{rmtpp_forward.1} parent=0 // pred_fallthru
    _
  // Predicated region
  $region6: #{rmtpp_forward.1} parent=0 // pred_check
    _
  $region7: #{rmtpp_forward.1} parent=0 // pred_check_branch
    %15 = sbr.rel (0) target = $region9
  $region8: #{rmtpp_forward.1} parent=0 // pred_region
    _
  $region9: #{rmtpp_forward.1} parent=0 // pred_fallthru
    _
  // Predicated region
  $region10: #{rmtpp_forward.1} parent=0 // pred_check
    _
  $region11: #{rmtpp_forward.1} parent=0 // pred_check_branch
    %17 = sbr.rel (0) target = $region13
  $region12: #{rmtpp_forward.1} parent=0 // pred_region
    _
  $region13: #{rmtpp_forward.1} parent=0 // pred_fallthru
    _
  // Predicated region
  $region14: #{rmtpp_forward.1} parent=0 // pred_check
    _
  $region15: #{rmtpp_forward.1} parent=0 // pred_check_branch
    %19 = sbr.rel (0) target = $region17
  $region16: #{rmtpp_forward.1} parent=0 // pred_region
    _
  $region17: #{rmtpp_forward.1} parent=0 // pred_fallthru
    _
  // Predicated region
  $region18: #{rmtpp_forward.1} parent=0 // pred_check
    _
  $region19: #{rmtpp_forward.1} parent=0 // pred_check_branch
    %21 = sbr.rel (0) target = $region21
  $region20: #{rmtpp_forward.1} parent=0 // pred_region
    _
  $region21: #{rmtpp_forward.1} parent=0 // pred_fallthru
    _
  // Predicated region
  $region22: #{rmtpp_forward.1} parent=0 // pred_check
    _
  $region23: #{rmtpp_forward.1} parent=0 // pred_check_branch
    %23 = sbr.rel (0) target = $region25
  $region24: #{rmtpp_forward.1} parent=0 // pred_region
    _
  $region25: #{rmtpp_forward.1} parent=0 // pred_fallthru
    _
  // Predicated region
  $region26: #{rmtpp_forward.1} parent=0 // pred_check
    _
  $region27: #{rmtpp_forward.1} parent=0 // pred_check_branch
    %25 = sbr.rel (0) target = $region29
  $region28: #{rmtpp_forward.1} parent=0 // pred_region
    _
  $region29: #{rmtpp_forward.1} parent=0 // pred_fallthru
    _
  %v27 = vld [vmem:[%s0] sm:$0xff]
  %v28 = vld [vmem:[%s0 + $0x8] sm:$0xff]
  %v29 = vld [vmem:[%s0 + $0x10] sm:$0xff]
  %v30 = vld [vmem:[%s0 + $0x18] sm:$0xff]
  %v31 = vld [vmem:[%s0 + $0x20] sm:$0xff]
  %v32 = vld [vmem:[%s0 + $0x28] sm:$0xff]
  %v33 = vld [vmem:[%s0 + $0x30] sm:$0xff]
  %v34 = vld [vmem:[%s0 + $0x38] sm:$0xff]
  %v35 = vadd.s32 %v27, 6
  %v36 = vadd.s32 %v28, 6
  %v37 = vadd.s32 %v29, 6
  %v38 = vadd.s32 %v30, 6
  %v39 = vadd.s32 %v31, 6
  %v40 = vadd.s32 %v32, 6
  %v41 = vadd.s32 %v33, 6
  %v42 = vadd.s32 %v34, 6
  %v43 = vlaneseq
  %v44 = vand.u32 %v43, 127
  %45 = vset.pattern.permute.xlu0 0
  %46 = vperm.xlu0 %45, %v27
  %v47 = vpop.permute.xlu0 %46
  %48 = vset.pattern.permute.xlu0 0
  %49 = vperm.xlu0 %48, %v28
  %v50 = vpop.permute.xlu0 %49
  %51 = vset.pattern.permute.xlu0 0
  %52 = vperm.xlu0 %51, %v29
  %v53 = vpop.permute.xlu0 %52
  %54 = vset.pattern.permute.xlu0 0
  %55 = vperm.xlu0 %54, %v30
  %v56 = vpop.permute.xlu0 %55
  %57 = vset.pattern.permute.xlu0 0
  %58 = vperm.xlu0 %57, %v31
  %v59 = vpop.permute.xlu0 %58
  %60 = vset.pattern.permute.xlu0 0
  %61 = vperm.xlu0 %60, %v32
  %v62 = vpop.permute.xlu0 %61
  %63 = vset.pattern.permute.xlu0 0
  %64 = vperm.xlu0 %63, %v33
  %v65 = vpop.permute.xlu0 %64
  %66 = vset.pattern.permute.xlu0 0
  %67 = vperm.xlu0 %66, %v34
  %v68 = vpop.permute.xlu0 %67
  %vm69 = vcmp.eq.s32.totalorder %v44, %v47
  %vm70 = vcmp.eq.s32.totalorder %v44, %v50
  %vm71 = vcmp.eq.s32.totalorder %v44, %v53
  %vm72 = vcmp.eq.s32.totalorder %v44, %v56
  %vm73 = vcmp.eq.s32.totalorder %v44, %v59
  %vm74 = vcmp.eq.s32.totalorder %v44, %v62
  %vm75 = vcmp.eq.s32.totalorder %v44, %v65
  %vm76 = vcmp.eq.s32.totalorder %v44, %v68
  %77 = vset.pattern.permute.xlu0 1
  %78 = vperm.xlu0 %77, %v35
  %v79 = vpop.permute.xlu0 %78
  %80 = vset.pattern.permute.xlu0 1
  %81 = vperm.xlu0 %80, %v36
  %v82 = vpop.permute.xlu0 %81
  %83 = vset.pattern.permute.xlu0 1
  %84 = vperm.xlu0 %83, %v37
  %v85 = vpop.permute.xlu0 %84
  %86 = vset.pattern.permute.xlu0 1
  %87 = vperm.xlu0 %86, %v38
  %v88 = vpop.permute.xlu0 %87
  %89 = vset.pattern.permute.xlu0 1
  %90 = vperm.xlu0 %89, %v39
  %v91 = vpop.permute.xlu0 %90
  %92 = vset.pattern.permute.xlu0 1
  %93 = vperm.xlu0 %92, %v40
  %v94 = vpop.permute.xlu0 %93
  %95 = vset.pattern.permute.xlu0 1
  %96 = vperm.xlu0 %95, %v41
  %v97 = vpop.permute.xlu0 %96
  %98 = vset.pattern.permute.xlu0 1
  %99 = vperm.xlu0 %98, %v42
  %v100 = vpop.permute.xlu0 %99
  %vm101 = vcmp.eq.s32.totalorder %v44, %v79
  %vm102 = vcmp.eq.s32.totalorder %v44, %v82
  %vm103 = vcmp.eq.s32.totalorder %v44, %v85
  %vm104 = vcmp.eq.s32.totalorder %v44, %v88
  %vm105 = vcmp.eq.s32.totalorder %v44, %v91
  %vm106 = vcmp.eq.s32.totalorder %v44, %v94
  %vm107 = vcmp.eq.s32.totalorder %v44, %v97
  %vm108 = vcmp.eq.s32.totalorder %v44, %v100
  %vm109 = vmor %vm69, %vm101
  %vm110 = vmor %vm70, %vm102
  %vm111 = vmor %vm71, %vm103
  %vm112 = vmor %vm72, %vm104
  %vm113 = vmor %vm73, %vm105
  %vm114 = vmor %vm74, %vm106
  %vm115 = vmor %vm75, %vm107
  %vm116 = vmor %vm76, %vm108
  %v117 = vsel %vm109, 1.0, 0.0
  %v118 = vsel %vm110, 1.0, 0.0
  %v119 = vsel %vm111, 1.0, 0.0
  %v120 = vsel %vm112, 1.0, 0.0
  %v121 = vsel %vm113, 1.0, 0.0
  %v122 = vsel %vm114, 1.0, 0.0
  %v123 = vsel %vm115, 1.0, 0.0
  %v124 = vsel %vm116, 1.0, 0.0
  %v125 = vpack.c.bf16 %v118, %v117
  %v126 = vpack.c.bf16 %v120, %v119
  %v127 = vpack.c.bf16 %v122, %v121
  %v128 = vpack.c.bf16 %v124, %v123
  %v129 = vld [vmem:[%s3] sm:$0xf]
  %v130 = vld [vmem:[%s3 + $0x4] sm:$0xf]
  %v131 = vld [vmem:[%s3 + $0x8] sm:$0xf]
  %v132 = vld [vmem:[%s3 + $0xc] sm:$0xf]
  %v133 = vld [vmem:[%s3 + $0x10] sm:$0xf]
  %v134 = vld [vmem:[%s3 + $0x14] sm:$0xf]
  %v135 = vld [vmem:[%s3 + $0x18] sm:$0xf]
  %v136 = vld [vmem:[%s3 + $0x1c] sm:$0xf]
  %v137 = vld [vmem:[%s3 + $0x20] sm:$0xf]
  %v138 = vld [vmem:[%s3 + $0x24] sm:$0xf]
  %v139 = vld [vmem:[%s3 + $0x28] sm:$0xf]
  %v140 = vld [vmem:[%s3 + $0x2c] sm:$0xf]
  %v141 = vld [vmem:[%s1] sm:$0xf]
  %v142 = vld [vmem:[%s1 + $0x4] sm:$0xf]
  %v143 = vld [vmem:[%s1 + $0x8] sm:$0xf]
  %v144 = vld [vmem:[%s1 + $0xc] sm:$0xf]
  %v145 = vld [vmem:[%s1 + $0x10] sm:$0xf]
  %v146 = vld [vmem:[%s1 + $0x14] sm:$0xf]
  %v147 = vld [vmem:[%s1 + $0x18] sm:$0xf]
  %v148 = vld [vmem:[%s1 + $0x1c] sm:$0xf]
  %v157 = vunpack.c.l.b16 %v141
  %v158 = vunpack.c.l.b16 %v142
  %v159 = vunpack.c.l.b16 %v143
  %v160 = vunpack.c.l.b16 %v144
  %v161 = vunpack.c.l.b16 %v145
  %v162 = vunpack.c.l.b16 %v146
  %v163 = vunpack.c.l.b16 %v147
  %v164 = vunpack.c.l.b16 %v148
  %v165 = vpack.c.b16 %v158, %v157
  %v166 = vpack.c.b16 %v160, %v159
  %v167 = vpack.c.b16 %v162, %v161
  %v168 = vpack.c.b16 %v164, %v163
  %v171 = vunpack.c.l.b16 %v131
  %v172 = vunpack.c.l.b16 %v132
  %v173 = vpack.c.b16 %v172, %v171
  %vm175 = vcmask 130048
  %v177 = vsel %vm175, %v165, 0
  %v180 = vsel %vm175, %v166, 0
  %v183 = vsel %vm175, %v167, 0
  %v186 = vsel %vm175, %v168, 0
  %188 = vmatpush.bf16.msra.mxu0 0
  %189 = vmatpush.bf16.msra.mxu0 0
  %190 = vmatpush.bf16.msra.mxu0 0
  %191 = vmatpush.bf16.msra.mxu0 0
  %192 = vmatpush.bf16.msra.mxu0 0
  %193 = vmatpush.bf16.msra.mxu0 0
  %194 = vmatpush.bf16.msra.mxu0 0
  %195 = vmatpush.bf16.msra.mxu0 %v173
  %196 = vmatmul.bf16.gmra.mxu0 %v177
  %v197 = vpop.f32.mrf.mxu0
  %v198 = vadd.f32 0.0, %v197
  %v199 = vpop.f32.mrf.mxu0
  %v200 = vadd.f32 0.0, %v199
  %201 = vmatmul.bf16.gmra.mxu0 %v180
  %v202 = vpop.f32.mrf.mxu0
  %v203 = vadd.f32 0.0, %v202
  %v204 = vpop.f32.mrf.mxu0
  %v205 = vadd.f32 0.0, %v204
  %206 = vmatmul.bf16.gmra.mxu0 %v183
  %v207 = vpop.f32.mrf.mxu0
  %v208 = vadd.f32 0.0, %v207
  %v209 = vpop.f32.mrf.mxu0
  %v210 = vadd.f32 0.0, %v209
  %211 = vmatmul.bf16.gmra.mxu0 %v186
  %v212 = vpop.f32.mrf.mxu0
  %v213 = vadd.f32 0.0, %v212
  %v214 = vpop.f32.mrf.mxu0
  %v215 = vadd.f32 0.0, %v214
  %216 = vdwg.mxu0
  %v219 = vunpack.c.l.b16 %v129
  %v220 = vunpack.c.l.b16 %v130
  %v221 = vpack.c.b16 %v220, %v219
  %v224 = vsel %vm175, %v125, 0
  %v227 = vsel %vm175, %v126, 0
  %v230 = vsel %vm175, %v127, 0
  %v233 = vsel %vm175, %v128, 0
  %235 = vmatpush.bf16.msra.mxu0 0
  %236 = vmatpush.bf16.msra.mxu0 0
  %237 = vmatpush.bf16.msra.mxu0 0
  %238 = vmatpush.bf16.msra.mxu0 0
  %239 = vmatpush.bf16.msra.mxu0 0
  %240 = vmatpush.bf16.msra.mxu0 0
  %241 = vmatpush.bf16.msra.mxu0 0
  %242 = vmatpush.bf16.msra.mxu0 %v221
  %243 = vmatmul.bf16.gmra.mxu0 %v224
  %v244 = vpop.f32.mrf.mxu0
  %v245 = vadd.f32 %v198, %v244
  %v246 = vpop.f32.mrf.mxu0
  %v247 = vadd.f32 %v200, %v246
  %248 = vmatmul.bf16.gmra.mxu0 %v227
  %v249 = vpop.f32.mrf.mxu0
  %v250 = vadd.f32 %v203, %v249
  %v251 = vpop.f32.mrf.mxu0
  %v252 = vadd.f32 %v205, %v251
  %253 = vmatmul.bf16.gmra.mxu0 %v230
  %v254 = vpop.f32.mrf.mxu0
  %v255 = vadd.f32 %v208, %v254
  %v256 = vpop.f32.mrf.mxu0
  %v257 = vadd.f32 %v210, %v256
  %258 = vmatmul.bf16.gmra.mxu0 %v233
  %v259 = vpop.f32.mrf.mxu0
  %v260 = vadd.f32 %v213, %v259
  %v261 = vpop.f32.mrf.mxu0
  %v262 = vadd.f32 %v215, %v261
  %263 = vdwg.mxu0
  %v264 = vld [vmem:[%s2] sm:$0xff]
  %v269 = vunpack.c.l.b16 %v133
  %v270 = vunpack.c.l.b16 %v134
  %v271 = vunpack.c.l.b16 %v135
  %v272 = vunpack.c.l.b16 %v136
  %v273 = vpack.c.b16 %v270, %v269
  %v274 = vpack.c.b16 %v272, %v271
  %vm277 = vcmask 261120
  %v279 = vsel %vm277, 0, 0
  %281 = vmatpush.bf16.msra.mxu0 0
  %282 = vmatpush.bf16.msra.mxu0 0
  %283 = vmatpush.bf16.msra.mxu0 0
  %284 = vmatpush.bf16.msra.mxu0 0
  %285 = vmatpush.bf16.msra.mxu0 0
  %286 = vmatpush.bf16.msra.mxu0 0
  %287 = vmatpush.bf16.msra.mxu0 %v274
  %288 = vmatpush.bf16.msra.mxu0 %v273
  %289 = vmatmul.bf16.gmra.mxu0 %v279
  %v290 = vpop.f32.mrf.mxu0
  %v291 = vadd.f32 0.0, %v290
  %v292 = vpop.f32.mrf.mxu0
  %293 = vdwg.mxu0
  %v294 = vadd.f32 %v245, %v291
  %v295 = vmax.f32 %v294, 0.0
  %vm296 = vcmp.gt.s32.totalorder %v264, 0
  %v297 = vsel %vm296, 1, 0
  %298 = vset.pattern.permute.xlu0 0
  %299 = vperm.xlu0 %298, %v297
  %v300 = vpop.permute.xlu0 %299
  %vm301 = vcmp.eq.s32.totalorder %v300, 1
  %v302 = vsel %vm301, %v295, 0.0
  %v303 = vpack.c.bf16 %v295, %v295
  %v305 = vsel %vm277, %v303, 0
  %307 = vmatpush.bf16.msra.mxu0 0
  %308 = vmatpush.bf16.msra.mxu0 0
  %309 = vmatpush.bf16.msra.mxu0 0
  %310 = vmatpush.bf16.msra.mxu0 0
  %311 = vmatpush.bf16.msra.mxu0 0
  %312 = vmatpush.bf16.msra.mxu0 0
  %313 = vmatpush.bf16.msra.mxu0 %v274
  %314 = vmatpush.bf16.msra.mxu0 %v273
  %315 = vmatmul.bf16.gmra.mxu0 %v305
  %v316 = vpop.f32.mrf.mxu0
  %v317 = vadd.f32 0.0, %v316
  %v318 = vpop.f32.mrf.mxu0
  %319 = vdwg.mxu0
  %v320 = vadd.f32 %v247, %v317
  %v321 = vmax.f32 %v320, 0.0
  %vm322 = vcmp.gt.s32.totalorder %v264, 1
  %v323 = vsel %vm322, 1, 0
  %324 = vset.pattern.permute.xlu0 0
  %325 = vperm.xlu0 %324, %v323
  %v326 = vpop.permute.xlu0 %325
  %vm327 = vcmp.eq.s32.totalorder %v326, 1
  %v328 = vsel %vm327, %v321, 0.0
  %v329 = vpack.c.bf16 %v321, %v321
  %v331 = vsel %vm277, %v329, 0
  %333 = vmatpush.bf16.msra.mxu0 0
  %334 = vmatpush.bf16.msra.mxu0 0
  %335 = vmatpush.bf16.msra.mxu0 0
  %336 = vmatpush.bf16.msra.mxu0 0
  %337 = vmatpush.bf16.msra.mxu0 0
  %338 = vmatpush.bf16.msra.mxu0 0
  %339 = vmatpush.bf16.msra.mxu0 %v274
  %340 = vmatpush.bf16.msra.mxu0 %v273
  %341 = vmatmul.bf16.gmra.mxu0 %v331
  %v342 = vpop.f32.mrf.mxu0
  %v343 = vadd.f32 0.0, %v342
  %v344 = vpop.f32.mrf.mxu0
  %345 = vdwg.mxu0
  %v346 = vadd.f32 %v250, %v343
  %v347 = vmax.f32 %v346, 0.0
  %vm348 = vcmp.gt.s32.totalorder %v264, 2
  %v349 = vsel %vm348, 1, 0
  %350 = vset.pattern.permute.xlu0 0
  %351 = vperm.xlu0 %350, %v349
  %v352 = vpop.permute.xlu0 %351
  %vm353 = vcmp.eq.s32.totalorder %v352, 1
  %v354 = vsel %vm353, %v347, 0.0
  %v355 = vpack.c.bf16 %v347, %v347
  %v357 = vsel %vm277, %v355, 0
  %359 = vmatpush.bf16.msra.mxu0 0
  %360 = vmatpush.bf16.msra.mxu0 0
  %361 = vmatpush.bf16.msra.mxu0 0
  %362 = vmatpush.bf16.msra.mxu0 0
  %363 = vmatpush.bf16.msra.mxu0 0
  %364 = vmatpush.bf16.msra.mxu0 0
  %365 = vmatpush.bf16.msra.mxu0 %v274
  %366 = vmatpush.bf16.msra.mxu0 %v273
  %367 = vmatmul.bf16.gmra.mxu0 %v357
  %v368 = vpop.f32.mrf.mxu0
  %v369 = vadd.f32 0.0, %v368
  %v370 = vpop.f32.mrf.mxu0
  %371 = vdwg.mxu0
  %v372 = vadd.f32 %v252, %v369
  %v373 = vmax.f32 %v372, 0.0
  %vm374 = vcmp.gt.s32.totalorder %v264, 3
  %v375 = vsel %vm374, 1, 0
  %376 = vset.pattern.permute.xlu0 0
  %377 = vperm.xlu0 %376, %v375
  %v378 = vpop.permute.xlu0 %377
  %vm379 = vcmp.eq.s32.totalorder %v378, 1
  %v380 = vsel %vm379, %v373, 0.0
  %v381 = vpack.c.bf16 %v373, %v373
  %v383 = vsel %vm277, %v381, 0
  %385 = vmatpush.bf16.msra.mxu0 0
  %386 = vmatpush.bf16.msra.mxu0 0
  %387 = vmatpush.bf16.msra.mxu0 0
  %388 = vmatpush.bf16.msra.mxu0 0
  %389 = vmatpush.bf16.msra.mxu0 0
  %390 = vmatpush.bf16.msra.mxu0 0
  %391 = vmatpush.bf16.msra.mxu0 %v274
  %392 = vmatpush.bf16.msra.mxu0 %v273
  %393 = vmatmul.bf16.gmra.mxu0 %v383
  %v394 = vpop.f32.mrf.mxu0
  %v395 = vadd.f32 0.0, %v394
  %v396 = vpop.f32.mrf.mxu0
  %397 = vdwg.mxu0
  %v398 = vadd.f32 %v255, %v395
  %v399 = vmax.f32 %v398, 0.0
  %vm400 = vcmp.gt.s32.totalorder %v264, 4
  %v401 = vsel %vm400, 1, 0
  %402 = vset.pattern.permute.xlu0 0
  %403 = vperm.xlu0 %402, %v401
  %v404 = vpop.permute.xlu0 %403
  %vm405 = vcmp.eq.s32.totalorder %v404, 1
  %v406 = vsel %vm405, %v399, 0.0
  %v407 = vpack.c.bf16 %v399, %v399
  %v409 = vsel %vm277, %v407, 0
  %411 = vmatpush.bf16.msra.mxu0 0
  %412 = vmatpush.bf16.msra.mxu0 0
  %413 = vmatpush.bf16.msra.mxu0 0
  %414 = vmatpush.bf16.msra.mxu0 0
  %415 = vmatpush.bf16.msra.mxu0 0
  %416 = vmatpush.bf16.msra.mxu0 0
  %417 = vmatpush.bf16.msra.mxu0 %v274
  %418 = vmatpush.bf16.msra.mxu0 %v273
  %419 = vmatmul.bf16.gmra.mxu0 %v409
  %v420 = vpop.f32.mrf.mxu0
  %v421 = vadd.f32 0.0, %v420
  %v422 = vpop.f32.mrf.mxu0
  %423 = vdwg.mxu0
  %v424 = vadd.f32 %v257, %v421
  %v425 = vmax.f32 %v424, 0.0
  %vm426 = vcmp.gt.s32.totalorder %v264, 5
  %v427 = vsel %vm426, 1, 0
  %428 = vset.pattern.permute.xlu0 0
  %429 = vperm.xlu0 %428, %v427
  %v430 = vpop.permute.xlu0 %429
  %vm431 = vcmp.eq.s32.totalorder %v430, 1
  %v432 = vsel %vm431, %v425, 0.0
  %v433 = vpack.c.bf16 %v425, %v425
  %v435 = vsel %vm277, %v433, 0
  %437 = vmatpush.bf16.msra.mxu0 0
  %438 = vmatpush.bf16.msra.mxu0 0
  %439 = vmatpush.bf16.msra.mxu0 0
  %440 = vmatpush.bf16.msra.mxu0 0
  %441 = vmatpush.bf16.msra.mxu0 0
  %442 = vmatpush.bf16.msra.mxu0 0
  %443 = vmatpush.bf16.msra.mxu0 %v274
  %444 = vmatpush.bf16.msra.mxu0 %v273
  %445 = vmatmul.bf16.gmra.mxu0 %v435
  %v446 = vpop.f32.mrf.mxu0
  %v447 = vadd.f32 0.0, %v446
  %v448 = vpop.f32.mrf.mxu0
  %449 = vdwg.mxu0
  %v450 = vadd.f32 %v260, %v447
  %v451 = vmax.f32 %v450, 0.0
  %vm452 = vcmp.gt.s32.totalorder %v264, 6
  %v453 = vsel %vm452, 1, 0
  %454 = vset.pattern.permute.xlu0 0
  %455 = vperm.xlu0 %454, %v453
  %v456 = vpop.permute.xlu0 %455
  %vm457 = vcmp.eq.s32.totalorder %v456, 1
  %v458 = vsel %vm457, %v451, 0.0
  %v459 = vpack.c.bf16 %v451, %v451
  %v461 = vsel %vm277, %v459, 0
  %463 = vmatpush.bf16.msra.mxu0 0
  %464 = vmatpush.bf16.msra.mxu0 0
  %465 = vmatpush.bf16.msra.mxu0 0
  %466 = vmatpush.bf16.msra.mxu0 0
  %467 = vmatpush.bf16.msra.mxu0 0
  %468 = vmatpush.bf16.msra.mxu0 0
  %469 = vmatpush.bf16.msra.mxu0 %v274
  %470 = vmatpush.bf16.msra.mxu0 %v273
  %471 = vmatmul.bf16.gmra.mxu0 %v461
  %v472 = vpop.f32.mrf.mxu0
  %v473 = vadd.f32 0.0, %v472
  %v474 = vpop.f32.mrf.mxu0
  %475 = vdwg.mxu0
  %v476 = vadd.f32 %v262, %v473
  %v477 = vmax.f32 %v476, 0.0
  %vm478 = vcmp.gt.s32.totalorder %v264, 7
  %v479 = vsel %vm478, 1, 0
  %480 = vset.pattern.permute.xlu0 0
  %481 = vperm.xlu0 %480, %v479
  %v482 = vpop.permute.xlu0 %481
  %vm483 = vcmp.eq.s32.totalorder %v482, 1
  %v484 = vsel %vm483, %v477, 0.0
  %v485 = vpack.c.bf16 %v328, %v302
  %v486 = vpack.c.bf16 %v380, %v354
  %v487 = vpack.c.bf16 %v432, %v406
  %v488 = vpack.c.bf16 %v484, %v458
  %v489 = vld [vmem:[%s5] sm:$0x1]
  %v491 = vperm.slane %v489, 0
  %v497 = vunpack.c.l.b16 %v137
  %v498 = vunpack.c.l.b16 %v138
  %v499 = vunpack.c.l.b16 %v139
  %v500 = vunpack.c.l.b16 %v140
  %v501 = vpack.c.b16 %v498, %v497
  %v502 = vpack.c.b16 %v500, %v499
  %v506 = vsel %vm277, %v485, 0
  %v509 = vsel %vm277, %v486, 0
  %v512 = vsel %vm277, %v487, 0
  %v515 = vsel %vm277, %v488, 0
  %517 = vmatpush.bf16.msra.mxu0 0
  %518 = vmatpush.bf16.msra.mxu0 0
  %519 = vmatpush.bf16.msra.mxu0 0
  %520 = vmatpush.bf16.msra.mxu0 0
  %521 = vmatpush.bf16.msra.mxu0 0
  %522 = vmatpush.bf16.msra.mxu0 0
  %523 = vmatpush.bf16.msra.mxu0 %v502
  %524 = vmatpush.bf16.msra.mxu0 %v501
  %525 = vmatmul.bf16.gmra.mxu0 %v506
  %v526 = vpop.f32.mrf.mxu0
  %v527 = vadd.f32 %v491, %v526
  %v528 = vpop.f32.mrf.mxu0
  %v529 = vadd.f32 %v491, %v528
  %530 = vmatmul.bf16.gmra.mxu0 %v509
  %v531 = vpop.f32.mrf.mxu0
  %v532 = vadd.f32 %v491, %v531
  %v533 = vpop.f32.mrf.mxu0
  %v534 = vadd.f32 %v491, %v533
  %535 = vmatmul.bf16.gmra.mxu0 %v512
  %v536 = vpop.f32.mrf.mxu0
  %v537 = vadd.f32 %v491, %v536
  %v538 = vpop.f32.mrf.mxu0
  %v539 = vadd.f32 %v491, %v538
  %540 = vmatmul.bf16.gmra.mxu0 %v515
  %v541 = vpop.f32.mrf.mxu0
  %v542 = vadd.f32 %v491, %v541
  %v543 = vpop.f32.mrf.mxu0
  %v544 = vadd.f32 %v491, %v543
  %545 = vdwg.mxu0
  %v546 = vtanh.pop %v527
  %v547 = vtanh.pop %v529
  %v548 = vtanh.pop %v532
  %v549 = vtanh.pop %v534
  %v550 = vtanh.pop %v537
  %v551 = vtanh.pop %v539
  %v552 = vtanh.pop %v542
  %v553 = vtanh.pop %v544
  %v554 = vpack.c.bf16 %v547, %v546
  %v555 = vpack.c.bf16 %v549, %v548
  %v556 = vpack.c.bf16 %v551, %v550
  %v557 = vpack.c.bf16 %v553, %v552
  %v558 = vld [vmem:[%s4] sm:$0xf]
  %v559 = vld [vmem:[%s4 + $0x4] sm:$0xf]
  %v560 = vld [vmem:[%s4 + $0x8] sm:$0xf]
  %v561 = vld [vmem:[%s4 + $0xc] sm:$0xf]
  %v562 = vld [vmem:[%s6] sm:$0x1]
  %v564 = vperm.slane %v562, 0
  %v570 = vunpack.c.l.b16 %v558
  %v571 = vunpack.c.l.b16 %v559
  %v572 = vunpack.c.l.b16 %v560
  %v573 = vunpack.c.l.b16 %v561
  %v574 = vpack.c.b16 %v571, %v570
  %v575 = vpack.c.b16 %v573, %v572
  %v579 = vsel %vm277, %v554, 0
  %v582 = vsel %vm277, %v555, 0
  %v585 = vsel %vm277, %v556, 0
  %v588 = vsel %vm277, %v557, 0
  %590 = vmatpush.bf16.msra.mxu0 0
  %591 = vmatpush.bf16.msra.mxu0 0
  %592 = vmatpush.bf16.msra.mxu0 0
  %593 = vmatpush.bf16.msra.mxu0 0
  %594 = vmatpush.bf16.msra.mxu0 0
  %595 = vmatpush.bf16.msra.mxu0 0
  %596 = vmatpush.bf16.msra.mxu0 %v575
  %597 = vmatpush.bf16.msra.mxu0 %v574
  %598 = vmatmul.bf16.gmra.mxu0 %v579
  %v599 = vpop.f32.mrf.mxu0
  %v600 = vadd.f32 %v564, %v599
  %v601 = vpop.f32.mrf.mxu0
  %v602 = vadd.f32 %v564, %v601
  %603 = vmatmul.bf16.gmra.mxu0 %v582
  %v604 = vpop.f32.mrf.mxu0
  %v605 = vadd.f32 %v564, %v604
  %v606 = vpop.f32.mrf.mxu0
  %v607 = vadd.f32 %v564, %v606
  %608 = vmatmul.bf16.gmra.mxu0 %v585
  %v609 = vpop.f32.mrf.mxu0
  %v610 = vadd.f32 %v564, %v609
  %v611 = vpop.f32.mrf.mxu0
  %v612 = vadd.f32 %v564, %v611
  %613 = vmatmul.bf16.gmra.mxu0 %v588
  %v614 = vpop.f32.mrf.mxu0
  %v615 = vadd.f32 %v564, %v614
  %v616 = vpop.f32.mrf.mxu0
  %v617 = vadd.f32 %v564, %v616
  %618 = vdwg.mxu0
  %619 = vst [vmem:[%s7] sm:$0xff] %v600
  %620 = vst [vmem:[%s7 + $0x8] sm:$0xff] %v602
  %621 = vst [vmem:[%s7 + $0x10] sm:$0xff] %v605
  %622 = vst [vmem:[%s7 + $0x18] sm:$0xff] %v607
  %623 = vst [vmem:[%s7 + $0x20] sm:$0xff] %v610
  %624 = vst [vmem:[%s7 + $0x28] sm:$0xff] %v612
  %625 = vst [vmem:[%s7 + $0x30] sm:$0xff] %v615
  %626 = vst [vmem:[%s7 + $0x38] sm:$0xff] %v617
  // Predicated region
  $region30: #{rmtpp_forward.1} parent=0 // pred_check
    _
  $region31: #{rmtpp_forward.1} parent=0 // pred_check_branch
    %628 = sbr.rel (0) target = $region33
  $region32: #{rmtpp_forward.1} parent=0 // pred_region
    _
  $region33: #{rmtpp_forward.1} parent=0 // pred_fallthru
    _
  // Predicated region
  $region34: #{rmtpp_forward.1} parent=0 // pred_check
    _
  $region35: #{rmtpp_forward.1} parent=0 // pred_check_branch
    %630 = sbr.rel (0) target = $region37
  $region36: #{rmtpp_forward.1} parent=0 // pred_region
    _
  $region37: #{rmtpp_forward.1} parent=0 // pred_fallthru
    _

</llo_original>
